<compile_context>
chip_gen: v6e
topology: v6e:2x2x1
jax: 0.10.0
libtpu: 0.0.40
codegen_flags: <defaults>
</compile_context>

<pallas_src>
import jax
import jax.numpy as jnp
from jax.experimental import pallas as pl
from jax.experimental.pallas import tpu as pltpu

EPS = 1e-3  # BatchNorm2d(eps=0.001) in the PyTorch module


def conv_bn_relu_kernel(w_ref, x_ref, gamma_ref, beta_ref, o_ref):
    # w_ref:     (Cout, Cin)   1x1 conv weight
    # x_ref:     (Cin,  M)     channels-major activations (M = N*H*W)
    # gamma_ref: (Cout, 1)     BN weight
    # beta_ref:  (Cout, 1)     BN bias
    # o_ref:     (Cout, M)
    y = jnp.dot(w_ref[...], x_ref[...], preferred_element_type=jnp.float32)

    # BatchNorm2d training-mode stats, single pass: per-channel biased
    # mean / E[y^2] over the lane axis (XLU reductions), then
    # var = E[y^2] - mean^2 clamped at 0 against negative round-off.
    mean = jnp.mean(y, axis=1, keepdims=True)             # (Cout, 1)
    mean_sq = jnp.mean(y * y, axis=1, keepdims=True)      # (Cout, 1)
    var = jnp.maximum(mean_sq - mean * mean, 0.0)         # (Cout, 1)

    # Fold the BN affine into one scale/shift and fuse with ReLU (one VPU pass).
    scale = gamma_ref[...] * jax.lax.rsqrt(var + EPS)     # (Cout, 1)
    shift = beta_ref[...] - mean * scale                  # (Cout, 1)
    o_ref[...] = jnp.maximum(y * scale + shift, 0.0).astype(o_ref.dtype)


def conv2d_bn_relu(x_nchw, weight, gamma, beta):
    """x_nchw: [N, Cin, H, W]; weight: [Cout, Cin] (1x1 conv, no bias)."""
    N, Cin, H, W = x_nchw.shape
    Cout = weight.shape[0]
    M = N * H * W

    if N == 1:
        # Free view: NCHW with N=1 is already channels-major over spatial.
        x_mat = x_nchw.reshape(Cin, M)
    else:
        # General-N fallback (not hit by the module's N=1 input).
        x_mat = jnp.transpose(x_nchw, (1, 0, 2, 3)).reshape(Cin, M)

    gamma2 = gamma.reshape(Cout, 1)
    beta2 = beta.reshape(Cout, 1)

    cost = pl.CostEstimate(
        flops=2 * M * Cin * Cout + 6 * M * Cout,
        transcendentals=Cout,
        bytes_accessed=4 * (Cout * Cin + Cin * M + 2 * Cout + Cout * M),
    )

    # Whole problem fits trivially in VMEM on v5e/v6e/v7x; no grid, no
    # pipelining, no double-buffering — operands are whole-array VMEM refs.
    vmem_spec = pl.BlockSpec(memory_space=pltpu.MemorySpace.VMEM)

    out_mat = pl.pallas_call(
        conv_bn_relu_kernel,
        out_shape=jax.ShapeDtypeStruct((Cout, M), jnp.float32),
        in_specs=[vmem_spec, vmem_spec, vmem_spec, vmem_spec],
        out_specs=vmem_spec,
        cost_estimate=cost,
    )(weight, x_mat, gamma2, beta2)

    if N == 1:
        # Free view back to NCHW.
        return out_mat.reshape(1, Cout, H, W)
    return jnp.transpose(out_mat.reshape(Cout, N, H, W), (1, 0, 2, 3))


def reference(x_nchw, weight, gamma, beta):
    """Pure-JAX reference (PyTorch forward semantics, training-mode BN)."""
    N, Cin, H, W = x_nchw.shape
    Cout = weight.shape[0]
    x_mat = jnp.transpose(x_nchw, (0, 2, 3, 1)).reshape(-1, Cin)   # (M, Cin)
    y = x_mat @ weight.T                                           # (M, Cout)
    mean = jnp.mean(y, axis=0, keepdims=True)
    var = jnp.mean((y - mean) ** 2, axis=0, keepdims=True)
    y = (y - mean) / jnp.sqrt(var + EPS) * gamma[None, :] + beta[None, :]
    y = jnp.maximum(y, 0.0)
    return jnp.transpose(y.reshape(N, H, W, Cout), (0, 3, 1, 2))


if __name__ == "__main__":
    key = jax.random.PRNGKey(0)
    kx, kw = jax.random.split(key)

    # Shapes from the module: x121 = randn([1, 512, 14, 14]), Conv2d(512, 64, 1x1)
    N, Cin, H, W = 1, 512, 14, 14
    Cout = 64

    x121 = jax.random.normal(kx, (N, Cin, H, W), dtype=jnp.float32)
    weight = jax.random.normal(kw, (Cout, Cin), dtype=jnp.float32) * 0.02
    gamma = jnp.ones((Cout,), dtype=jnp.float32)   # BatchNorm2d weight
    beta = jnp.zeros((Cout,), dtype=jnp.float32)   # BatchNorm2d bias

    out = conv2d_bn_relu(x121, weight, gamma, beta)
    out = jax.block_until_ready(out)

    ref = reference(x121, weight, gamma, beta)
    assert out.shape == (N, Cout, H, W)
    assert jnp.allclose(out, ref, atol=1e-3, rtol=1e-3), (
        float(jnp.max(jnp.abs(out - ref))))

    print("KERNEL_OK")
</pallas_src>

<mosaic_0001>
module attributes {stable_mosaic.version = 11 : i64} {
  func.func @conv_bn_relu_kernel(%arg0: memref<64x512xf32, #tpu.memory_space<vmem>>, %arg1: memref<512x196xf32, #tpu.memory_space<vmem>>, %arg2: memref<64x1xf32, #tpu.memory_space<vmem>>, %arg3: memref<64x1xf32, #tpu.memory_space<vmem>>, %arg4: memref<64x196xf32, #tpu.memory_space<vmem>>) attributes {dimension_semantics = [], scalar_prefetch = 0 : i64, scratch_operands = 0 : i64, tpu.core_type = #tpu.core_type<tc>} {
    %c0 = arith.constant 0 : index
    %c0_0 = arith.constant 0 : index
    %0 = vector.load %arg0[%c0, %c0_0] : memref<64x512xf32, #tpu.memory_space<vmem>>, vector<64x512xf32>
    %c0_1 = arith.constant 0 : index
    %c0_2 = arith.constant 0 : index
    %1 = vector.load %arg1[%c0_1, %c0_2] : memref<512x196xf32, #tpu.memory_space<vmem>>, vector<512x196xf32>
    %cst = arith.constant dense<0.000000e+00> : vector<64x196xf32>
    %2 = tpu.matmul %0, %1, %cst {dimension_numbers = #tpu.dot_dimension_numbers<[1], [0], [0], [1], [0, 0, 1, 1], [], []>} : vector<64x512xf32>, vector<512x196xf32>, vector<64x196xf32> -> vector<64x196xf32>
    %cst_3 = arith.constant dense<0.000000e+00> : vector<64xf32>
    %3 = vector.multi_reduction <add>, %2, %cst_3 [1] : vector<64x196xf32> to vector<64xf32>
    %4 = vector.shape_cast %3 : vector<64xf32> to vector<64x1xf32>
    %cst_4 = arith.constant 1.960000e+02 : f32
    %5 = vector.broadcast %cst_4 : f32 to vector<64x1xf32>
    %6 = arith.divf %4, %5 : vector<64x1xf32>
    %7 = arith.mulf %2, %2 : vector<64x196xf32>
    %cst_5 = arith.constant dense<0.000000e+00> : vector<64xf32>
    %8 = vector.multi_reduction <add>, %7, %cst_5 [1] : vector<64x196xf32> to vector<64xf32>
    %9 = vector.shape_cast %8 : vector<64xf32> to vector<64x1xf32>
    %cst_6 = arith.constant 1.960000e+02 : f32
    %10 = vector.broadcast %cst_6 : f32 to vector<64x1xf32>
    %11 = arith.divf %9, %10 : vector<64x1xf32>
    %12 = arith.mulf %6, %6 : vector<64x1xf32>
    %13 = arith.subf %11, %12 : vector<64x1xf32>
    %cst_7 = arith.constant 0.000000e+00 : f32
    %14 = vector.broadcast %cst_7 : f32 to vector<64x1xf32>
    %15 = arith.maximumf %13, %14 : vector<64x1xf32>
    %c0_8 = arith.constant 0 : index
    %c0_9 = arith.constant 0 : index
    %16 = vector.load %arg2[%c0_8, %c0_9] : memref<64x1xf32, #tpu.memory_space<vmem>>, vector<64x1xf32>
    %cst_10 = arith.constant 1.000000e-03 : f32
    %17 = vector.broadcast %cst_10 : f32 to vector<64x1xf32>
    %18 = arith.addf %15, %17 : vector<64x1xf32>
    %19 = math.rsqrt %18 : vector<64x1xf32>
    %20 = arith.mulf %16, %19 : vector<64x1xf32>
    %c0_11 = arith.constant 0 : index
    %c0_12 = arith.constant 0 : index
    %21 = vector.load %arg3[%c0_11, %c0_12] : memref<64x1xf32, #tpu.memory_space<vmem>>, vector<64x1xf32>
    %22 = arith.mulf %6, %20 : vector<64x1xf32>
    %23 = arith.subf %21, %22 : vector<64x1xf32>
    %24 = vector.broadcast %20 : vector<64x1xf32> to vector<64x196xf32>
    %25 = arith.mulf %2, %24 : vector<64x196xf32>
    %26 = vector.broadcast %23 : vector<64x1xf32> to vector<64x196xf32>
    %27 = arith.addf %25, %26 : vector<64x196xf32>
    %cst_13 = arith.constant 0.000000e+00 : f32
    %28 = vector.broadcast %cst_13 : f32 to vector<64x196xf32>
    %29 = arith.maximumf %27, %28 : vector<64x196xf32>
    %c0_14 = arith.constant 0 : index
    %c0_15 = arith.constant 0 : index
    %30 = vector.load %arg4[%c0_14, %c0_15] : memref<64x196xf32, #tpu.memory_space<vmem>>, vector<64x196xf32>
    tpu.vector_store %arg4[%c0_14, %c0_15], %29 {strides = array<i32>} : memref<64x196xf32, #tpu.memory_space<vmem>>, vector<64x196xf32>,
    return
  }
}

</mosaic_0001>

<llo_original>
// kernel: tpu_custom_call.1
$region0: #{tpu_custom_call.1}
  #allocation0 [shape = 'u32[]', space=smem, size = 0x4, offset = 0x4, fixed_abs, tag = 'smem constant byte address 0x4 - core index']
  #allocation1 [shape = 'u32[144,128]{1,0:T(1,128)}', space=vmem, size = 0x12000, scoped, tag = 'internal scratch']
  %s0 = inlined_call_operand.vmem [shape: f32[64,512], index: 0, kind: input, shape index: {}]
  %s1 = inlined_call_operand.vmem [shape: f32[512,196], index: 1, kind: input, shape index: {}]
  %s2 = inlined_call_operand.vmem [shape: f32[64,1], index: 2, kind: input, shape index: {}]
  %s3 = inlined_call_operand.vmem [shape: f32[64,1], index: 3, kind: input, shape index: {}]
  %s4 = inlined_call_operand.hbm [shape: f32[64,196], index: 4, kind: output, shape index: {}]
  %s5 = sld [smem:[#allocation0]]
  $region26: #{tpu_custom_call.1} parent=0
    _
  %s7 = ssub.s32 1, %s5
  %s8 = scalar_select 0, %s7, %s5
  $region1: #{tpu_custom_call.1} parent=0
    #allocation2 [shape = 'u8[65536]{0}', space=vmem, size = 0x10000, scoped, tag = 'output window, operand 0, single buffered']
    #allocation3 [shape = 's32[1]{0}', space=sflag, size = 0x4, scoped, tag = 'scoped memory for tpu_custom_call.1']
    %9 = vsyncpa [#allocation3], 0
    // Predicated region
    $region2: #{tpu_custom_call.1} parent=1 // pred_check
      _
    $region3: #{tpu_custom_call.1} parent=1 // pred_check_branch
      %11 = sbr.rel (0) target = $region5
    $region4: #{tpu_custom_call.1} parent=1 // pred_region
      _
    $region5: #{tpu_custom_call.1} parent=1 // pred_fallthru
      _
    // Predicated region
    $region6: #{tpu_custom_call.1} parent=1 // pred_check
      _
    $region7: #{tpu_custom_call.1} parent=1 // pred_check_branch
      %13 = sbr.rel (0) target = $region9
    $region8: #{tpu_custom_call.1} parent=1 // pred_region
      _
    $region9: #{tpu_custom_call.1} parent=1 // pred_fallthru
      _
    // Predicated region
    $region10: #{tpu_custom_call.1} parent=1 // pred_check
      _
    $region11: #{tpu_custom_call.1} parent=1 // pred_check_branch
      %15 = sbr.rel (0) target = $region13
    $region12: #{tpu_custom_call.1} parent=1 // pred_region
      _
    $region13: #{tpu_custom_call.1} parent=1 // pred_fallthru
      _
    // Predicated region
    $region14: #{tpu_custom_call.1} parent=1 // pred_check
      _
    $region15: #{tpu_custom_call.1} parent=1 // pred_check_branch
      %17 = sbr.rel (0) target = $region17
    $region16: #{tpu_custom_call.1} parent=1 // pred_region
      _
    $region17: #{tpu_custom_call.1} parent=1 // pred_fallthru
      _
    %v18 = vld [vmem:[%s0] sm:$0xff]
    %v19 = vld [vmem:[%s0 + $0x8] sm:$0xff]
    %v20 = vld [vmem:[%s0 + $0x10] sm:$0xff]
    %v21 = vld [vmem:[%s0 + $0x18] sm:$0xff]
    %v22 = vld [vmem:[%s0 + $0x20] sm:$0xff]
    %v23 = vld [vmem:[%s0 + $0x28] sm:$0xff]
    %v24 = vld [vmem:[%s0 + $0x30] sm:$0xff]
    %v25 = vld [vmem:[%s0 + $0x38] sm:$0xff]
    %v26 = vld [vmem:[%s0 + $0x40] sm:$0xff]
    %v27 = vld [vmem:[%s0 + $0x48] sm:$0xff]
    %v28 = vld [vmem:[%s0 + $0x50] sm:$0xff]
    %v29 = vld [vmem:[%s0 + $0x58] sm:$0xff]
    %v30 = vld [vmem:[%s0 + $0x60] sm:$0xff]
    %v31 = vld [vmem:[%s0 + $0x68] sm:$0xff]
    %v32 = vld [vmem:[%s0 + $0x70] sm:$0xff]
    %v33 = vld [vmem:[%s0 + $0x78] sm:$0xff]
    %v34 = vld [vmem:[%s0 + $0x80] sm:$0xff]
    %v35 = vld [vmem:[%s0 + $0x88] sm:$0xff]
    %v36 = vld [vmem:[%s0 + $0x90] sm:$0xff]
    %v37 = vld [vmem:[%s0 + $0x98] sm:$0xff]
    %v38 = vld [vmem:[%s0 + $0xa0] sm:$0xff]
    %v39 = vld [vmem:[%s0 + $0xa8] sm:$0xff]
    %v40 = vld [vmem:[%s0 + $0xb0] sm:$0xff]
    %v41 = vld [vmem:[%s0 + $0xb8] sm:$0xff]
    %v42 = vld [vmem:[%s0 + $0xc0] sm:$0xff]
    %v43 = vld [vmem:[%s0 + $0xc8] sm:$0xff]
    %v44 = vld [vmem:[%s0 + $0xd0] sm:$0xff]
    %v45 = vld [vmem:[%s0 + $0xd8] sm:$0xff]
    %v46 = vld [vmem:[%s0 + $0xe0] sm:$0xff]
    %v47 = vld [vmem:[%s0 + $0xe8] sm:$0xff]
    %v48 = vld [vmem:[%s0 + $0xf0] sm:$0xff]
    %v49 = vld [vmem:[%s0 + $0xf8] sm:$0xff]
    %v50 = vld [vmem:[%s1] sm:$0xff]
    %v51 = vld [vmem:[%s1 + $0x8] sm:$0xff]
    %v52 = vld [vmem:[%s1 + $0x10] sm:$0xff]
    %v53 = vld [vmem:[%s1 + $0x18] sm:$0xff]
    %v54 = vld [vmem:[%s1 + $0x20] sm:$0xff]
    %v55 = vld [vmem:[%s1 + $0x28] sm:$0xff]
    %v56 = vld [vmem:[%s1 + $0x30] sm:$0xff]
    %v57 = vld [vmem:[%s1 + $0x38] sm:$0xff]
    %v58 = vld [vmem:[%s1 + $0x40] sm:$0xff]
    %v59 = vld [vmem:[%s1 + $0x48] sm:$0xff]
    %v60 = vld [vmem:[%s1 + $0x50] sm:$0xff]
    %v61 = vld [vmem:[%s1 + $0x58] sm:$0xff]
    %v62 = vld [vmem:[%s1 + $0x60] sm:$0xff]
    %v63 = vld [vmem:[%s1 + $0x68] sm:$0xff]
    %v64 = vld [vmem:[%s1 + $0x70] sm:$0xff]
    %v65 = vld [vmem:[%s1 + $0x78] sm:$0xff]
    %v66 = vld [vmem:[%s1 + $0x80] sm:$0xff]
    %v67 = vld [vmem:[%s1 + $0x88] sm:$0xff]
    %v68 = vld [vmem:[%s1 + $0x90] sm:$0xff]
    %v69 = vld [vmem:[%s1 + $0x98] sm:$0xff]
    %v70 = vld [vmem:[%s1 + $0xa0] sm:$0xff]
    %v71 = vld [vmem:[%s1 + $0xa8] sm:$0xff]
    %v72 = vld [vmem:[%s1 + $0xb0] sm:$0xff]
    %v73 = vld [vmem:[%s1 + $0xb8] sm:$0xff]
    %v74 = vld [vmem:[%s1 + $0xc0] sm:$0xff]
    %v75 = vld [vmem:[%s1 + $0xc8] sm:$0xff]
    %v76 = vld [vmem:[%s1 + $0xd0] sm:$0xff]
    %v77 = vld [vmem:[%s1 + $0xd8] sm:$0xff]
    %v78 = vld [vmem:[%s1 + $0xe0] sm:$0xff]
    %v79 = vld [vmem:[%s1 + $0xe8] sm:$0xff]
    %v80 = vld [vmem:[%s1 + $0xf0] sm:$0xff]
    %v81 = vld [vmem:[%s1 + $0xf8] sm:$0xff]
    %v82 = vld [vmem:[%s1 + $0x100] sm:$0xff]
    %v83 = vld [vmem:[%s1 + $0x108] sm:$0xff]
    %v84 = vld [vmem:[%s1 + $0x110] sm:$0xff]
    %v85 = vld [vmem:[%s1 + $0x118] sm:$0xff]
    %v86 = vld [vmem:[%s1 + $0x120] sm:$0xff]
    %v87 = vld [vmem:[%s1 + $0x128] sm:$0xff]
    %v88 = vld [vmem:[%s1 + $0x130] sm:$0xff]
    %v89 = vld [vmem:[%s1 + $0x138] sm:$0xff]
    %v90 = vld [vmem:[%s1 + $0x140] sm:$0xff]
    %v91 = vld [vmem:[%s1 + $0x148] sm:$0xff]
    %v92 = vld [vmem:[%s1 + $0x150] sm:$0xff]
    %v93 = vld [vmem:[%s1 + $0x158] sm:$0xff]
    %v94 = vld [vmem:[%s1 + $0x160] sm:$0xff]
    %v95 = vld [vmem:[%s1 + $0x168] sm:$0xff]
    %v96 = vld [vmem:[%s1 + $0x170] sm:$0xff]
    %v97 = vld [vmem:[%s1 + $0x178] sm:$0xff]
    %v98 = vld [vmem:[%s1 + $0x180] sm:$0xff]
    %v99 = vld [vmem:[%s1 + $0x188] sm:$0xff]
    %v100 = vld [vmem:[%s1 + $0x190] sm:$0xff]
    %v101 = vld [vmem:[%s1 + $0x198] sm:$0xff]
    %v102 = vld [vmem:[%s1 + $0x1a0] sm:$0xff]
    %v103 = vld [vmem:[%s1 + $0x1a8] sm:$0xff]
    %v104 = vld [vmem:[%s1 + $0x1b0] sm:$0xff]
    %v105 = vld [vmem:[%s1 + $0x1b8] sm:$0xff]
    %v106 = vld [vmem:[%s1 + $0x1c0] sm:$0xff]
    %v107 = vld [vmem:[%s1 + $0x1c8] sm:$0xff]
    %v108 = vld [vmem:[%s1 + $0x1d0] sm:$0xff]
    %v109 = vld [vmem:[%s1 + $0x1d8] sm:$0xff]
    %v110 = vld [vmem:[%s1 + $0x1e0] sm:$0xff]
    %v111 = vld [vmem:[%s1 + $0x1e8] sm:$0xff]
    %v112 = vld [vmem:[%s1 + $0x1f0] sm:$0xff]
    %v113 = vld [vmem:[%s1 + $0x1f8] sm:$0xff]
    %v114 = vld [vmem:[%s1 + $0x200] sm:$0xff]
    %v115 = vld [vmem:[%s1 + $0x208] sm:$0xff]
    %v116 = vld [vmem:[%s1 + $0x210] sm:$0xff]
    %v117 = vld [vmem:[%s1 + $0x218] sm:$0xff]
    %v118 = vld [vmem:[%s1 + $0x220] sm:$0xff]
    %v119 = vld [vmem:[%s1 + $0x228] sm:$0xff]
    %v120 = vld [vmem:[%s1 + $0x230] sm:$0xff]
    %v121 = vld [vmem:[%s1 + $0x238] sm:$0xff]
    %v122 = vld [vmem:[%s1 + $0x240] sm:$0xff]
    %v123 = vld [vmem:[%s1 + $0x248] sm:$0xff]
    %v124 = vld [vmem:[%s1 + $0x250] sm:$0xff]
    %v125 = vld [vmem:[%s1 + $0x258] sm:$0xff]
    %v126 = vld [vmem:[%s1 + $0x260] sm:$0xff]
    %v127 = vld [vmem:[%s1 + $0x268] sm:$0xff]
    %v128 = vld [vmem:[%s1 + $0x270] sm:$0xff]
    %v129 = vld [vmem:[%s1 + $0x278] sm:$0xff]
    %v130 = vld [vmem:[%s1 + $0x280] sm:$0xff]
    %v131 = vld [vmem:[%s1 + $0x288] sm:$0xff]
    %v132 = vld [vmem:[%s1 + $0x290] sm:$0xff]
    %v133 = vld [vmem:[%s1 + $0x298] sm:$0xff]
    %v134 = vld [vmem:[%s1 + $0x2a0] sm:$0xff]
    %v135 = vld [vmem:[%s1 + $0x2a8] sm:$0xff]
    %v136 = vld [vmem:[%s1 + $0x2b0] sm:$0xff]
    %v137 = vld [vmem:[%s1 + $0x2b8] sm:$0xff]
    %v138 = vld [vmem:[%s1 + $0x2c0] sm:$0xff]
    %v139 = vld [vmem:[%s1 + $0x2c8] sm:$0xff]
    %v140 = vld [vmem:[%s1 + $0x2d0] sm:$0xff]
    %v141 = vld [vmem:[%s1 + $0x2d8] sm:$0xff]
    %v142 = vld [vmem:[%s1 + $0x2e0] sm:$0xff]
    %v143 = vld [vmem:[%s1 + $0x2e8] sm:$0xff]
    %v144 = vld [vmem:[%s1 + $0x2f0] sm:$0xff]
    %v145 = vld [vmem:[%s1 + $0x2f8] sm:$0xff]
    %v146 = vld [vmem:[%s1 + $0x300] sm:$0xff]
    %v147 = vld [vmem:[%s1 + $0x308] sm:$0xff]
    %v148 = vld [vmem:[%s1 + $0x310] sm:$0xff]
    %v149 = vld [vmem:[%s1 + $0x318] sm:$0xff]
    %v150 = vld [vmem:[%s1 + $0x320] sm:$0xff]
    %v151 = vld [vmem:[%s1 + $0x328] sm:$0xff]
    %v152 = vld [vmem:[%s1 + $0x330] sm:$0xff]
    %v153 = vld [vmem:[%s1 + $0x338] sm:$0xff]
    %v154 = vld [vmem:[%s1 + $0x340] sm:$0xff]
    %v155 = vld [vmem:[%s1 + $0x348] sm:$0xff]
    %v156 = vld [vmem:[%s1 + $0x350] sm:$0xff]
    %v157 = vld [vmem:[%s1 + $0x358] sm:$0xff]
    %v158 = vld [vmem:[%s1 + $0x360] sm:$0xff]
    %v159 = vld [vmem:[%s1 + $0x368] sm:$0xff]
    %v160 = vld [vmem:[%s1 + $0x370] sm:$0xff]
    %v161 = vld [vmem:[%s1 + $0x378] sm:$0xff]
    %v162 = vld [vmem:[%s1 + $0x380] sm:$0xff]
    %v163 = vld [vmem:[%s1 + $0x388] sm:$0xff]
    %v164 = vld [vmem:[%s1 + $0x390] sm:$0xff]
    %v165 = vld [vmem:[%s1 + $0x398] sm:$0xff]
    %v166 = vld [vmem:[%s1 + $0x3a0] sm:$0xff]
    %v167 = vld [vmem:[%s1 + $0x3a8] sm:$0xff]
    %v168 = vld [vmem:[%s1 + $0x3b0] sm:$0xff]
    %v169 = vld [vmem:[%s1 + $0x3b8] sm:$0xff]
    %v170 = vld [vmem:[%s1 + $0x3c0] sm:$0xff]
    %v171 = vld [vmem:[%s1 + $0x3c8] sm:$0xff]
    %v172 = vld [vmem:[%s1 + $0x3d0] sm:$0xff]
    %v173 = vld [vmem:[%s1 + $0x3d8] sm:$0xff]
    %v174 = vld [vmem:[%s1 + $0x3e0] sm:$0xff]
    %v175 = vld [vmem:[%s1 + $0x3e8] sm:$0xff]
    %v176 = vld [vmem:[%s1 + $0x3f0] sm:$0xff]
    %v177 = vld [vmem:[%s1 + $0x3f8] sm:$0xff]
    %178 = vmatprep.subr.mxu0 %v81
    %179 = vmatpush1.msra.mxu0 %v80
    %180 = vmatprep.subr.mxu0 %v79
    %181 = vmatpush1.msra.mxu0 %v78
    %182 = vmatprep.subr.mxu0 %v77
    %183 = vmatpush1.msra.mxu0 %v76
    %184 = vmatprep.subr.mxu0 %v75
    %185 = vmatpush1.msra.mxu0 %v74
    %186 = vmatprep.subr.mxu0 %v73
    %187 = vmatpush1.msra.mxu0 %v72
    %188 = vmatprep.subr.mxu0 %v71
    %189 = vmatpush1.msra.mxu0 %v70
    %190 = vmatprep.subr.mxu0 %v69
    %191 = vmatpush1.msra.mxu0 %v68
    %192 = vmatprep.subr.mxu0 %v67
    %193 = vmatpush1.msra.mxu0 %v66
    %194 = vmatprep.subr.mxu0 %v65
    %195 = vmatpush1.msra.mxu0 %v64
    %196 = vmatprep.subr.mxu0 %v63
    %197 = vmatpush1.msra.mxu0 %v62
    %198 = vmatprep.subr.mxu0 %v61
    %199 = vmatpush1.msra.mxu0 %v60
    %200 = vmatprep.subr.mxu0 %v59
    %201 = vmatpush1.msra.mxu0 %v58
    %202 = vmatprep.subr.mxu0 %v57
    %203 = vmatpush1.msra.mxu0 %v56
    %204 = vmatprep.subr.mxu0 %v55
    %205 = vmatpush1.msra.mxu0 %v54
    %206 = vmatprep.subr.mxu0 %v53
    %207 = vmatpush1.msra.mxu0 %v52
    %208 = vmatprep.subr.mxu0 %v51
    %209 = vmatpush1.msra.mxu0 %v50
    %210 = vmatprep.subr.mxu0 %v113
    %211 = vmatpush2.msra.mxu0 %v112
    %212 = vmatprep.subr.mxu0 %v111
    %213 = vmatpush2.msra.mxu0 %v110
    %214 = vmatprep.subr.mxu0 %v109
    %215 = vmatpush2.msra.mxu0 %v108
    %216 = vmatprep.subr.mxu0 %v107
    %217 = vmatpush2.msra.mxu0 %v106
    %218 = vmatprep.subr.mxu0 %v105
    %219 = vmatpush2.msra.mxu0 %v104
    %220 = vmatprep.subr.mxu0 %v103
    %221 = vmatpush2.msra.mxu0 %v102
    %222 = vmatprep.subr.mxu0 %v101
    %223 = vmatpush2.msra.mxu0 %v100
    %224 = vmatprep.subr.mxu0 %v99
    %225 = vmatpush2.msra.mxu0 %v98
    %226 = vmatprep.subr.mxu0 %v97
    %227 = vmatpush2.msra.mxu0 %v96
    %228 = vmatprep.subr.mxu0 %v95
    %229 = vmatpush2.msra.mxu0 %v94
    %230 = vmatprep.subr.mxu0 %v93
    %231 = vmatpush2.msra.mxu0 %v92
    %232 = vmatprep.subr.mxu0 %v91
    %233 = vmatpush2.msra.mxu0 %v90
    %234 = vmatprep.subr.mxu0 %v89
    %235 = vmatpush2.msra.mxu0 %v88
    %236 = vmatprep.subr.mxu0 %v87
    %237 = vmatpush2.msra.mxu0 %v86
    %238 = vmatprep.subr.mxu0 %v85
    %239 = vmatpush2.msra.mxu0 %v84
    %240 = vmatprep.subr.mxu0 %v83
    %241 = vmatpush2.msra.mxu0 %v82
    %242 = vmatprep.mubr.f32.mxu0 %v19
    %243 = vmatmul.mubr.f32.gmra.mxu0 %v18
    %v244 = vpop.f32.mrf.mxu0
    %v245 = vadd.f32 0.0, %v244
    %v246 = vpop.f32.mrf.mxu0
    %v247 = vadd.f32 0.0, %v246
    %248 = vmatprep.mubr.f32.mxu0 %v23
    %249 = vmatmul.mubr.f32.gmra.mxu0 %v22
    %v250 = vpop.f32.mrf.mxu0
    %v251 = vadd.f32 0.0, %v250
    %v252 = vpop.f32.mrf.mxu0
    %v253 = vadd.f32 0.0, %v252
    %254 = vmatprep.mubr.f32.mxu0 %v27
    %255 = vmatmul.mubr.f32.gmra.mxu0 %v26
    %v256 = vpop.f32.mrf.mxu0
    %v257 = vadd.f32 0.0, %v256
    %v258 = vpop.f32.mrf.mxu0
    %v259 = vadd.f32 0.0, %v258
    %260 = vmatprep.mubr.f32.mxu0 %v31
    %261 = vmatmul.mubr.f32.gmra.mxu0 %v30
    %v262 = vpop.f32.mrf.mxu0
    %v263 = vadd.f32 0.0, %v262
    %v264 = vpop.f32.mrf.mxu0
    %v265 = vadd.f32 0.0, %v264
    %266 = vmatprep.mubr.f32.mxu0 %v35
    %267 = vmatmul.mubr.f32.gmra.mxu0 %v34
    %v268 = vpop.f32.mrf.mxu0
    %v269 = vadd.f32 0.0, %v268
    %v270 = vpop.f32.mrf.mxu0
    %v271 = vadd.f32 0.0, %v270
    %272 = vmatprep.mubr.f32.mxu0 %v39
    %273 = vmatmul.mubr.f32.gmra.mxu0 %v38
    %v274 = vpop.f32.mrf.mxu0
    %v275 = vadd.f32 0.0, %v274
    %v276 = vpop.f32.mrf.mxu0
    %v277 = vadd.f32 0.0, %v276
    %278 = vmatprep.mubr.f32.mxu0 %v43
    %279 = vmatmul.mubr.f32.gmra.mxu0 %v42
    %v280 = vpop.f32.mrf.mxu0
    %v281 = vadd.f32 0.0, %v280
    %v282 = vpop.f32.mrf.mxu0
    %v283 = vadd.f32 0.0, %v282
    %284 = vmatprep.mubr.f32.mxu0 %v47
    %285 = vmatmul.mubr.f32.gmra.mxu0 %v46
    %v286 = vpop.f32.mrf.mxu0
    %v287 = vadd.f32 0.0, %v286
    %v288 = vpop.f32.mrf.mxu0
    %v289 = vadd.f32 0.0, %v288
    %290 = vdwg.mxu0
    %291 = vmatprep.subr.mxu0 %v145
    %292 = vmatpush1.msra.mxu0 %v144
    %293 = vmatprep.subr.mxu0 %v143
    %294 = vmatpush1.msra.mxu0 %v142
    %295 = vmatprep.subr.mxu0 %v141
    %296 = vmatpush1.msra.mxu0 %v140
    %297 = vmatprep.subr.mxu0 %v139
    %298 = vmatpush1.msra.mxu0 %v138
    %299 = vmatprep.subr.mxu0 %v137
    %300 = vmatpush1.msra.mxu0 %v136
    %301 = vmatprep.subr.mxu0 %v135
    %302 = vmatpush1.msra.mxu0 %v134
    %303 = vmatprep.subr.mxu0 %v133
    %304 = vmatpush1.msra.mxu0 %v132
    %305 = vmatprep.subr.mxu0 %v131
    %306 = vmatpush1.msra.mxu0 %v130
    %307 = vmatprep.subr.mxu0 %v129
    %308 = vmatpush1.msra.mxu0 %v128
    %309 = vmatprep.subr.mxu0 %v127
    %310 = vmatpush1.msra.mxu0 %v126
    %311 = vmatprep.subr.mxu0 %v125
    %312 = vmatpush1.msra.mxu0 %v124
    %313 = vmatprep.subr.mxu0 %v123
    %314 = vmatpush1.msra.mxu0 %v122
    %315 = vmatprep.subr.mxu0 %v121
    %316 = vmatpush1.msra.mxu0 %v120
    %317 = vmatprep.subr.mxu0 %v119
    %318 = vmatpush1.msra.mxu0 %v118
    %319 = vmatprep.subr.mxu0 %v117
    %320 = vmatpush1.msra.mxu0 %v116
    %321 = vmatprep.subr.mxu0 %v115
    %322 = vmatpush1.msra.mxu0 %v114
    %323 = vmatprep.subr.mxu0 %v177
    %324 = vmatpush2.msra.mxu0 %v176
    %325 = vmatprep.subr.mxu0 %v175
    %326 = vmatpush2.msra.mxu0 %v174
    %327 = vmatprep.subr.mxu0 %v173
    %328 = vmatpush2.msra.mxu0 %v172
    %329 = vmatprep.subr.mxu0 %v171
    %330 = vmatpush2.msra.mxu0 %v170
    %331 = vmatprep.subr.mxu0 %v169
    %332 = vmatpush2.msra.mxu0 %v168
    %333 = vmatprep.subr.mxu0 %v167
    %334 = vmatpush2.msra.mxu0 %v166
    %335 = vmatprep.subr.mxu0 %v165
    %336 = vmatpush2.msra.mxu0 %v164
    %337 = vmatprep.subr.mxu0 %v163
    %338 = vmatpush2.msra.mxu0 %v162
    %339 = vmatprep.subr.mxu0 %v161
    %340 = vmatpush2.msra.mxu0 %v160
    %341 = vmatprep.subr.mxu0 %v159
    %342 = vmatpush2.msra.mxu0 %v158
    %343 = vmatprep.subr.mxu0 %v157
    %344 = vmatpush2.msra.mxu0 %v156
    %345 = vmatprep.subr.mxu0 %v155
    %346 = vmatpush2.msra.mxu0 %v154
    %347 = vmatprep.subr.mxu0 %v153
    %348 = vmatpush2.msra.mxu0 %v152
    %349 = vmatprep.subr.mxu0 %v151
    %350 = vmatpush2.msra.mxu0 %v150
    %351 = vmatprep.subr.mxu0 %v149
    %352 = vmatpush2.msra.mxu0 %v148
    %353 = vmatprep.subr.mxu0 %v147
    %354 = vmatpush2.msra.mxu0 %v146
    %355 = vmatprep.mubr.f32.mxu0 %v21
    %356 = vmatmul.mubr.f32.gmra.mxu0 %v20
    %v357 = vpop.f32.mrf.mxu0
    %v358 = vadd.f32 %v245, %v357
    %v359 = vpop.f32.mrf.mxu0
    %v360 = vadd.f32 %v247, %v359
    %361 = vmatprep.mubr.f32.mxu0 %v25
    %362 = vmatmul.mubr.f32.gmra.mxu0 %v24
    %v363 = vpop.f32.mrf.mxu0
    %v364 = vadd.f32 %v251, %v363
    %v365 = vpop.f32.mrf.mxu0
    %v366 = vadd.f32 %v253, %v365
    %367 = vmatprep.mubr.f32.mxu0 %v29
    %368 = vmatmul.mubr.f32.gmra.mxu0 %v28
    %v369 = vpop.f32.mrf.mxu0
    %v370 = vadd.f32 %v257, %v369
    %v371 = vpop.f32.mrf.mxu0
    %v372 = vadd.f32 %v259, %v371
    %373 = vmatprep.mubr.f32.mxu0 %v33
    %374 = vmatmul.mubr.f32.gmra.mxu0 %v32
    %v375 = vpop.f32.mrf.mxu0
    %v376 = vadd.f32 %v263, %v375
    %v377 = vpop.f32.mrf.mxu0
    %v378 = vadd.f32 %v265, %v377
    %379 = vmatprep.mubr.f32.mxu0 %v37
    %380 = vmatmul.mubr.f32.gmra.mxu0 %v36
    %v381 = vpop.f32.mrf.mxu0
    %v382 = vadd.f32 %v269, %v381
    %v383 = vpop.f32.mrf.mxu0
    %v384 = vadd.f32 %v271, %v383
    %385 = vmatprep.mubr.f32.mxu0 %v41
    %386 = vmatmul.mubr.f32.gmra.mxu0 %v40
    %v387 = vpop.f32.mrf.mxu0
    %v388 = vadd.f32 %v275, %v387
    %v389 = vpop.f32.mrf.mxu0
    %v390 = vadd.f32 %v277, %v389
    %391 = vmatprep.mubr.f32.mxu0 %v45
    %392 = vmatmul.mubr.f32.gmra.mxu0 %v44
    %v393 = vpop.f32.mrf.mxu0
    %v394 = vadd.f32 %v281, %v393
    %v395 = vpop.f32.mrf.mxu0
    %v396 = vadd.f32 %v283, %v395
    %397 = vmatprep.mubr.f32.mxu0 %v49
    %398 = vmatmul.mubr.f32.gmra.mxu0 %v48
    %v399 = vpop.f32.mrf.mxu0
    %v400 = vadd.f32 %v287, %v399
    %v401 = vpop.f32.mrf.mxu0
    %v402 = vadd.f32 %v289, %v401
    %403 = vdwg.mxu0
    %vm404 = vcmask 556032
    %v405 = vsel %vm404, %v360, 0.0
    %v406 = vadd.f32 %v358, %v405
    %407 = vadd.xlane.f32.xlu0 %v406
    %v408 = vpop.xlane.xlu0 %407
    %v409 = vsel %vm404, %v366, 0.0
    %v410 = vadd.f32 %v364, %v409
    %411 = vadd.xlane.f32.xlu0 %v410
    %v412 = vpop.xlane.xlu0 %411
    %v413 = vsel %vm404, %v372, 0.0
    %v414 = vadd.f32 %v370, %v413
    %415 = vadd.xlane.f32.xlu0 %v414
    %v416 = vpop.xlane.xlu0 %415
    %v417 = vsel %vm404, %v378, 0.0
    %v418 = vadd.f32 %v376, %v417
    %419 = vadd.xlane.f32.xlu0 %v418
    %v420 = vpop.xlane.xlu0 %419
    %v421 = vsel %vm404, %v384, 0.0
    %v422 = vadd.f32 %v382, %v421
    %423 = vadd.xlane.f32.xlu0 %v422
    %v424 = vpop.xlane.xlu0 %423
    %v425 = vsel %vm404, %v390, 0.0
    %v426 = vadd.f32 %v388, %v425
    %427 = vadd.xlane.f32.xlu0 %v426
    %v428 = vpop.xlane.xlu0 %427
    %v429 = vsel %vm404, %v396, 0.0
    %v430 = vadd.f32 %v394, %v429
    %431 = vadd.xlane.f32.xlu0 %v430
    %v432 = vpop.xlane.xlu0 %431
    %v433 = vsel %vm404, %v402, 0.0
    %v434 = vadd.f32 %v400, %v433
    %435 = vadd.xlane.f32.xlu0 %v434
    %v436 = vpop.xlane.xlu0 %435
    %v437 = vrcp.pop 196.0
    %v438 = vmul.f32 %v408, %v437
    %v439 = vmul.f32 %v412, %v437
    %v440 = vmul.f32 %v416, %v437
    %v441 = vmul.f32 %v420, %v437
    %v442 = vmul.f32 %v424, %v437
    %v443 = vmul.f32 %v428, %v437
    %v444 = vmul.f32 %v432, %v437
    %v445 = vmul.f32 %v436, %v437
    %v446 = vmul.f32 %v358, %v358
    %v447 = vmul.f32 %v360, %v360
    %v448 = vmul.f32 %v364, %v364
    %v449 = vmul.f32 %v366, %v366
    %v450 = vmul.f32 %v370, %v370
    %v451 = vmul.f32 %v372, %v372
    %v452 = vmul.f32 %v376, %v376
    %v453 = vmul.f32 %v378, %v378
    %v454 = vmul.f32 %v382, %v382
    %v455 = vmul.f32 %v384, %v384
    %v456 = vmul.f32 %v388, %v388
    %v457 = vmul.f32 %v390, %v390
    %v458 = vmul.f32 %v394, %v394
    %v459 = vmul.f32 %v396, %v396
    %v460 = vmul.f32 %v400, %v400
    %v461 = vmul.f32 %v402, %v402
    %v462 = vsel %vm404, %v447, 0.0
    %v463 = vadd.f32 %v446, %v462
    %464 = vadd.xlane.f32.xlu0 %v463
    %v465 = vpop.xlane.xlu0 %464
    %v466 = vsel %vm404, %v449, 0.0
    %v467 = vadd.f32 %v448, %v466
    %468 = vadd.xlane.f32.xlu0 %v467
    %v469 = vpop.xlane.xlu0 %468
    %v470 = vsel %vm404, %v451, 0.0
    %v471 = vadd.f32 %v450, %v470
    %472 = vadd.xlane.f32.xlu0 %v471
    %v473 = vpop.xlane.xlu0 %472
    %v474 = vsel %vm404, %v453, 0.0
    %v475 = vadd.f32 %v452, %v474
    %476 = vadd.xlane.f32.xlu0 %v475
    %v477 = vpop.xlane.xlu0 %476
    %v478 = vsel %vm404, %v455, 0.0
    %v479 = vadd.f32 %v454, %v478
    %480 = vadd.xlane.f32.xlu0 %v479
    %v481 = vpop.xlane.xlu0 %480
    %v482 = vsel %vm404, %v457, 0.0
    %v483 = vadd.f32 %v456, %v482
    %484 = vadd.xlane.f32.xlu0 %v483
    %v485 = vpop.xlane.xlu0 %484
    %v486 = vsel %vm404, %v459, 0.0
    %v487 = vadd.f32 %v458, %v486
    %488 = vadd.xlane.f32.xlu0 %v487
    %v489 = vpop.xlane.xlu0 %488
    %v490 = vsel %vm404, %v461, 0.0
    %v491 = vadd.f32 %v460, %v490
    %492 = vadd.xlane.f32.xlu0 %v491
    %v493 = vpop.xlane.xlu0 %492
    %v494 = vmul.f32 %v465, %v437
    %v495 = vmul.f32 %v469, %v437
    %v496 = vmul.f32 %v473, %v437
    %v497 = vmul.f32 %v477, %v437
    %v498 = vmul.f32 %v481, %v437
    %v499 = vmul.f32 %v485, %v437
    %v500 = vmul.f32 %v489, %v437
    %v501 = vmul.f32 %v493, %v437
    %v502 = vmul.f32 %v438, %v438
    %v503 = vmul.f32 %v439, %v439
    %v504 = vmul.f32 %v440, %v440
    %v505 = vmul.f32 %v441, %v441
    %v506 = vmul.f32 %v442, %v442
    %v507 = vmul.f32 %v443, %v443
    %v508 = vmul.f32 %v444, %v444
    %v509 = vmul.f32 %v445, %v445
    %v510 = vsub.f32 %v494, %v502
    %v511 = vsub.f32 %v495, %v503
    %v512 = vsub.f32 %v496, %v504
    %v513 = vsub.f32 %v497, %v505
    %v514 = vsub.f32 %v498, %v506
    %v515 = vsub.f32 %v499, %v507
    %v516 = vsub.f32 %v500, %v508
    %v517 = vsub.f32 %v501, %v509
    %v518 = vmax.f32 %v510, 0.0
    %v519 = vmax.f32 %v511, 0.0
    %v520 = vmax.f32 %v512, 0.0
    %v521 = vmax.f32 %v513, 0.0
    %v522 = vmax.f32 %v514, 0.0
    %v523 = vmax.f32 %v515, 0.0
    %v524 = vmax.f32 %v516, 0.0
    %v525 = vmax.f32 %v517, 0.0
    %v526 = vld [vmem:[%s2] sm:$0xff]
    %v527 = vld [vmem:[%s2 + $0x8] sm:$0xff]
    %v528 = vld [vmem:[%s2 + $0x10] sm:$0xff]
    %v529 = vld [vmem:[%s2 + $0x18] sm:$0xff]
    %v530 = vld [vmem:[%s2 + $0x20] sm:$0xff]
    %v531 = vld [vmem:[%s2 + $0x28] sm:$0xff]
    %v532 = vld [vmem:[%s2 + $0x30] sm:$0xff]
    %v533 = vld [vmem:[%s2 + $0x38] sm:$0xff]
    %v534 = vadd.f32 %v518, 0.001
    %v535 = vadd.f32 %v519, 0.001
    %v536 = vadd.f32 %v520, 0.001
    %v537 = vadd.f32 %v521, 0.001
    %v538 = vadd.f32 %v522, 0.001
    %v539 = vadd.f32 %v523, 0.001
    %v540 = vadd.f32 %v524, 0.001
    %v541 = vadd.f32 %v525, 0.001
    %v542 = vrsqrt.pop %v534
    %v543 = vrsqrt.pop %v535
    %v544 = vrsqrt.pop %v536
    %v545 = vrsqrt.pop %v537
    %v546 = vrsqrt.pop %v538
    %v547 = vrsqrt.pop %v539
    %v548 = vrsqrt.pop %v540
    %v549 = vrsqrt.pop %v541
    %v550 = vmul.f32 %v526, %v542
    %v551 = vmul.f32 %v527, %v543
    %v552 = vmul.f32 %v528, %v544
    %v553 = vmul.f32 %v529, %v545
    %v554 = vmul.f32 %v530, %v546
    %v555 = vmul.f32 %v531, %v547
    %v556 = vmul.f32 %v532, %v548
    %v557 = vmul.f32 %v533, %v549
    %v558 = vld [vmem:[%s3] sm:$0xff]
    %v559 = vld [vmem:[%s3 + $0x8] sm:$0xff]
    %v560 = vld [vmem:[%s3 + $0x10] sm:$0xff]
    %v561 = vld [vmem:[%s3 + $0x18] sm:$0xff]
    %v562 = vld [vmem:[%s3 + $0x20] sm:$0xff]
    %v563 = vld [vmem:[%s3 + $0x28] sm:$0xff]
    %v564 = vld [vmem:[%s3 + $0x30] sm:$0xff]
    %v565 = vld [vmem:[%s3 + $0x38] sm:$0xff]
    %v566 = vmul.f32 %v438, %v550
    %v567 = vmul.f32 %v439, %v551
    %v568 = vmul.f32 %v440, %v552
    %v569 = vmul.f32 %v441, %v553
    %v570 = vmul.f32 %v442, %v554
    %v571 = vmul.f32 %v443, %v555
    %v572 = vmul.f32 %v444, %v556
    %v573 = vmul.f32 %v445, %v557
    %v574 = vsub.f32 %v558, %v566
    %v575 = vsub.f32 %v559, %v567
    %v576 = vsub.f32 %v560, %v568
    %v577 = vsub.f32 %v561, %v569
    %v578 = vsub.f32 %v562, %v570
    %v579 = vsub.f32 %v563, %v571
    %v580 = vsub.f32 %v564, %v572
    %v581 = vsub.f32 %v565, %v573
    %583 = vset.pattern.permute.xlu0 0
    %584 = vperm.xlu0 %583, %v550
    %v585 = vpop.permute.xlu0 %584
    %588 = vset.pattern.permute.xlu0 0
    %589 = vperm.xlu0 %588, %v551
    %v590 = vpop.permute.xlu0 %589
    %593 = vset.pattern.permute.xlu0 0
    %594 = vperm.xlu0 %593, %v552
    %v595 = vpop.permute.xlu0 %594
    %598 = vset.pattern.permute.xlu0 0
    %599 = vperm.xlu0 %598, %v553
    %v600 = vpop.permute.xlu0 %599
    %603 = vset.pattern.permute.xlu0 0
    %604 = vperm.xlu0 %603, %v554
    %v605 = vpop.permute.xlu0 %604
    %608 = vset.pattern.permute.xlu0 0
    %609 = vperm.xlu0 %608, %v555
    %v610 = vpop.permute.xlu0 %609
    %613 = vset.pattern.permute.xlu0 0
    %614 = vperm.xlu0 %613, %v556
    %v615 = vpop.permute.xlu0 %614
    %618 = vset.pattern.permute.xlu0 0
    %619 = vperm.xlu0 %618, %v557
    %v620 = vpop.permute.xlu0 %619
    %v622 = vmul.f32 %v358, %v585
    %v623 = vmul.f32 %v360, %v585
    %v624 = vmul.f32 %v364, %v590
    %v625 = vmul.f32 %v366, %v590
    %v626 = vmul.f32 %v370, %v595
    %v627 = vmul.f32 %v372, %v595
    %v628 = vmul.f32 %v376, %v600
    %v629 = vmul.f32 %v378, %v600
    %v630 = vmul.f32 %v382, %v605
    %v631 = vmul.f32 %v384, %v605
    %v632 = vmul.f32 %v388, %v610
    %v633 = vmul.f32 %v390, %v610
    %v634 = vmul.f32 %v394, %v615
    %v635 = vmul.f32 %v396, %v615
    %v636 = vmul.f32 %v400, %v620
    %v637 = vmul.f32 %v402, %v620
    %639 = vset.pattern.permute.xlu0 0
    %640 = vperm.xlu0 %639, %v574
    %v641 = vpop.permute.xlu0 %640
    %644 = vset.pattern.permute.xlu0 0
    %645 = vperm.xlu0 %644, %v575
    %v646 = vpop.permute.xlu0 %645
    %649 = vset.pattern.permute.xlu0 0
    %650 = vperm.xlu0 %649, %v576
    %v651 = vpop.permute.xlu0 %650
    %654 = vset.pattern.permute.xlu0 0
    %655 = vperm.xlu0 %654, %v577
    %v656 = vpop.permute.xlu0 %655
    %659 = vset.pattern.permute.xlu0 0
    %660 = vperm.xlu0 %659, %v578
    %v661 = vpop.permute.xlu0 %660
    %664 = vset.pattern.permute.xlu0 0
    %665 = vperm.xlu0 %664, %v579
    %v666 = vpop.permute.xlu0 %665
    %669 = vset.pattern.permute.xlu0 0
    %670 = vperm.xlu0 %669, %v580
    %v671 = vpop.permute.xlu0 %670
    %674 = vset.pattern.permute.xlu0 0
    %675 = vperm.xlu0 %674, %v581
    %v676 = vpop.permute.xlu0 %675
    %v678 = vadd.f32 %v622, %v641
    %v679 = vadd.f32 %v623, %v641
    %v680 = vadd.f32 %v624, %v646
    %v681 = vadd.f32 %v625, %v646
    %v682 = vadd.f32 %v626, %v651
    %v683 = vadd.f32 %v627, %v651
    %v684 = vadd.f32 %v628, %v656
    %v685 = vadd.f32 %v629, %v656
    %v686 = vadd.f32 %v630, %v661
    %v687 = vadd.f32 %v631, %v661
    %v688 = vadd.f32 %v632, %v666
    %v689 = vadd.f32 %v633, %v666
    %v690 = vadd.f32 %v634, %v671
    %v691 = vadd.f32 %v635, %v671
    %v692 = vadd.f32 %v636, %v676
    %v693 = vadd.f32 %v637, %v676
    %v694 = vmax.f32 %v678, 0.0
    %v695 = vmax.f32 %v679, 0.0
    %v696 = vmax.f32 %v680, 0.0
    %v697 = vmax.f32 %v681, 0.0
    %v698 = vmax.f32 %v682, 0.0
    %v699 = vmax.f32 %v683, 0.0
    %v700 = vmax.f32 %v684, 0.0
    %v701 = vmax.f32 %v685, 0.0
    %v702 = vmax.f32 %v686, 0.0
    %v703 = vmax.f32 %v687, 0.0
    %v704 = vmax.f32 %v688, 0.0
    %v705 = vmax.f32 %v689, 0.0
    %v706 = vmax.f32 %v690, 0.0
    %v707 = vmax.f32 %v691, 0.0
    %v708 = vmax.f32 %v692, 0.0
    %v709 = vmax.f32 %v693, 0.0
    %710 = vst [vmem:[#allocation2] sm:$0xff] %v694
    %711 = vst.msk [vmem:[#allocation2 + $0x8] sm:$0xff] %vm404, %v695
    %712 = vst [vmem:[#allocation2 + $0x10] sm:$0xff] %v696
    %713 = vst.msk [vmem:[#allocation2 + $0x18] sm:$0xff] %vm404, %v697
    %714 = vst [vmem:[#allocation2 + $0x20] sm:$0xff] %v698
    %715 = vst.msk [vmem:[#allocation2 + $0x28] sm:$0xff] %vm404, %v699
    %716 = vst [vmem:[#allocation2 + $0x30] sm:$0xff] %v700
    %717 = vst.msk [vmem:[#allocation2 + $0x38] sm:$0xff] %vm404, %v701
    %718 = vst [vmem:[#allocation2 + $0x40] sm:$0xff] %v702
    %719 = vst.msk [vmem:[#allocation2 + $0x48] sm:$0xff] %vm404, %v703
    %720 = vst [vmem:[#allocation2 + $0x50] sm:$0xff] %v704
    %721 = vst.msk [vmem:[#allocation2 + $0x58] sm:$0xff] %vm404, %v705
    %722 = vst [vmem:[#allocation2 + $0x60] sm:$0xff] %v706
    %723 = vst.msk [vmem:[#allocation2 + $0x68] sm:$0xff] %vm404, %v707
    %724 = vst [vmem:[#allocation2 + $0x70] sm:$0xff] %v708
    %725 = vst.msk [vmem:[#allocation2 + $0x78] sm:$0xff] %vm404, %v709
    // Predicated region
    $region18: #{tpu_custom_call.1} parent=1 // pred_check
      _
    $region19: #{tpu_custom_call.1} parent=1 // pred_check_branch
      %727 = sbr.rel (0) target = $region21
    $region20: #{tpu_custom_call.1} parent=1 // pred_region
      %s729 = ssub.s32 2048, 2048
      %730 = vsyncadd [#allocation3], %s729
      %s731 = sshll.u32 [#allocation2], 4
      %s732 = int_to_ptr.vmem [resolvable:$true] %s731
      %737 = dma.vmem_to_hbm [thread:$0]  %s732, 2048, %s4, [#allocation3], 256, 256, 16
    $region21: #{tpu_custom_call.1} parent=1 // pred_fallthru
      _
    // Predicated region
    $region22: #{tpu_custom_call.1} parent=1 // pred_check
      _
    $region23: #{tpu_custom_call.1} parent=1 // pred_check_branch
      %739 = sbr.rel (0) target = $region25
    $region24: #{tpu_custom_call.1} parent=1 // pred_region
      %740 = dma.done [#allocation3], 2048
    $region25: #{tpu_custom_call.1} parent=1 // pred_fallthru
      _
    %741 = vsyncpa [#allocation3], 1

</llo_original>
